<compile_context>
chip_gen: v7x
topology: tpu7x:2x2x1
jax: 0.10.0
libtpu: 0.0.40
codegen_flags: <defaults>
</compile_context>

<pallas_src>
import functools

import jax
import jax.numpy as jnp
from jax import lax
from jax.experimental import pallas as pl
from jax.experimental.pallas import tpu as pltpu


def _round_up(a, b):
    return -(-a // b) * b


def _tpu_generation():
    """Best-effort chip generation from the default device (trace-time only)."""
    try:
        kind = jax.devices()[0].device_kind.lower()
    except Exception:
        return None
    if "v7" in kind:
        return "v7x"
    if "v6" in kind:
        return "v6e"
    if "v5" in kind:
        return "v5e"
    return None


def _choose_group(N, K, D_out, k_cap, d_cap=512):
    """Pick grouping factor G (must divide N so the reshape is a free bitcast).

    Preference: smallest G with both G*K and G*D_out multiples of 128
    (lane-dense input AND output); else smallest G with G*D_out a multiple of
    128 (lane-dense output); else 1.  G > 1 is capped so the block-diagonal
    kron weight stays within the MXU contraction depth.
    """
    tier1 = None
    for G in range(1, min(N, 128) + 1):
        if N % G:
            continue
        Kg, Dg = G * K, G * D_out
        if G > 1 and (Kg > k_cap or Dg > d_cap):
            break
        if Dg % 128 == 0 and Kg % 128 == 0:
            return G
        if Dg % 128 == 0 and tier1 is None:
            tier1 = G
    return tier1 if tier1 is not None else 1


def _wavelet_fused_kernel(x_ref, w_ref, b_ref, o_ref):
    # x_ref: (tile_g, Kg)   grouped, paired even/odd timestep features
    # w_ref: (Kg, Dg)       block-diagonal fused (conv o linear) weight
    # b_ref: (1, Dg)        tiled fused bias (f32)
    # o_ref: (tile_g, Dg)   lane-dense output
    acc = jnp.dot(x_ref[...], w_ref[...], preferred_element_type=jnp.float32)
    o_ref[...] = (acc + b_ref[...]).astype(o_ref.dtype)


@functools.partial(
    jax.jit,
    static_argnames=("force_pallas", "min_rows_for_pallas", "block_budget_override"),
)
def wavelet_transform_layer(x, w_high, b_high, w_low, b_low, w_rec, b_rec,
                            force_pallas=False, min_rows_for_pallas=1024,
                            block_budget_override=None):
    """x: (B, T, C_in). Returns (B, T//2, D_out)."""
    B, T, C_in = x.shape
    D_out = w_rec.shape[0]
    T_half = T // 2
    K = 2 * C_in
    N = B * T_half

    # Pair consecutive timesteps: row = [x[b,2t,:], x[b,2t+1,:]] (stride-2 k=2 conv).
    # Pure row-major reinterpretation -> no copy (slice is a no-op for even T).
    x_pair = x[:, : 2 * T_half, :].reshape(N, K)

    # Combined conv weight: rows = [tap k=0 ; tap k=1], cols = [high | low].
    def stack_taps(w):  # (Co/2, C_in, 2) -> (2*C_in, Co/2)
        return jnp.concatenate([w[:, :, 0].T, w[:, :, 1].T], axis=0)

    w_comb = jnp.concatenate([stack_taps(w_high), stack_taps(w_low)], axis=1)  # (K, D)
    b_comb = jnp.concatenate([b_high, b_low], axis=0)                          # (D,)

    # Fold the reconstruct Linear into the conv.  Exact in f32; for low-precision
    # x/weights the rounding order differs slightly from the two-stage forward.
    w_fused = (w_comb @ w_rec.T).astype(x.dtype)                 # (K, D_out)
    b_fused = (b_comb @ w_rec.T + b_rec).astype(jnp.float32)     # (D_out,)

    # Tiny problems: pallas_call launch overhead dwarfs the work -> plain XLA.
    if (not force_pallas) and N < min_rows_for_pallas:
        out = (x_pair @ w_fused + b_fused).astype(x.dtype)
        return out.reshape(B, T_half, D_out)

    gen = _tpu_generation()
    itemsize = jnp.dtype(x.dtype).itemsize
    sub = {1: 32, 2: 16}.get(itemsize, 8)          # dtype-aware sublane granule

    # Per-generation budget for ONE (input block + output block); double-buffered
    # footprint stays inside every generation's scoped VMEM default.
    if gen == "v7x":
        block_budget, k_cap, ncores = 14 << 20, 256, 2
    elif gen == "v6e":
        block_budget, k_cap, ncores = 12 << 20, 256, 1
    else:  # v5e / unknown: conservative (16 MiB scoped default).
        block_budget, k_cap, ncores = 6 << 20, 128, 1
    if block_budget_override is not None:
        block_budget = int(block_budget_override)

    # Lane-dense grouping: G divides N, so this reshape is also a free bitcast.
    G = _choose_group(N, K, D_out, k_cap)
    Kg, Dg = G * K, G * D_out
    N_g = N // G
    x_g = x_pair.reshape(N_g, Kg)

    w_bd = jnp.kron(jnp.eye(G, dtype=w_fused.dtype), w_fused)    # (Kg, Dg) block-diag
    b_bd = jnp.tile(b_fused, G).reshape(1, Dg)

    # Row tile from the VMEM budget only (no artificial cap).
    bytes_per_grouped_row = (Kg + Dg) * itemsize
    tile_g = max(sub, (block_budget // bytes_per_grouped_row) // sub * sub)
    if tile_g >= N_g:
        if ncores >= 2 and N_g >= 2 * sub:
            # v7x only: keep >= 2 grid steps so both TensorCores get work.
            tile_g = _round_up(-(-N_g // 2), sub)
        else:
            tile_g = N_g       # single full-extent block (allowed by tiling rule)

    grid = (pl.cdiv(N_g, tile_g),)
    # Invariant: any rows of the last block beyond N_g read unspecified data and
    # produce output rows that Pallas masks out on store; since the matmul is
    # row-wise, in-bounds outputs never depend on them.

    cost = pl.CostEstimate(
        flops=2 * N * K * D_out,                     # true useful FLOPs
        transcendentals=0,
        bytes_accessed=N * (K + D_out) * itemsize
        + Kg * Dg * jnp.dtype(w_bd.dtype).itemsize + Dg * 4,
    )

    out_g = pl.pallas_call(
        _wavelet_fused_kernel,
        out_shape=jax.ShapeDtypeStruct((N_g, Dg), x.dtype),
        grid_spec=pltpu.PrefetchScalarGridSpec(
            num_scalar_prefetch=0,
            grid=grid,
            in_specs=[
                pl.BlockSpec((tile_g, Kg), lambda i: (i, 0)),
                pl.BlockSpec((Kg, Dg), lambda i: (0, 0)),
                pl.BlockSpec((1, Dg), lambda i: (0, 0)),
            ],
            out_specs=pl.BlockSpec((tile_g, Dg), lambda i: (i, 0)),
        ),
        compiler_params=pltpu.CompilerParams(
            dimension_semantics=("parallel",)
        ),
        cost_estimate=cost,
    )(x_g, w_bd, b_bd)

    # Free row-major reinterpretation back to (B, T_half, D_out) -- no slice/copy.
    return out_g.reshape(B, T_half, D_out)


def _reference(x, w_high, b_high, w_low, b_low, w_rec, b_rec):
    """Pure-JAX reference matching the PyTorch forward (NCW Conv1d)."""
    x_t = jnp.transpose(x, (0, 2, 1))  # (B, C_in, T)

    def conv1d(inp, w, b):
        out = lax.conv_general_dilated(
            inp, w, window_strides=(2,), padding="VALID",
            dimension_numbers=("NCH", "OIH", "NCH"),
        )
        return out + b[None, :, None]

    hf = conv1d(x_t, w_high, b_high)
    lf = conv1d(x_t, w_low, b_low)
    ms = jnp.concatenate([hf, lf], axis=1)   # (B, D_out, T//2)
    ms = jnp.transpose(ms, (0, 2, 1))        # (B, T//2, D_out)
    return ms @ w_rec.T + b_rec


if __name__ == "__main__":
    key = jax.random.PRNGKey(0)
    B, T, input_dim, output_dim = 2, 16, 8, 32
    Co_half = output_dim // 2

    ks = jax.random.split(key, 9)
    x = jax.random.normal(ks[0], (B, T, input_dim), dtype=jnp.float32)

    def unif(k, shape, fan_in):
        bound = 1.0 / jnp.sqrt(fan_in)
        return jax.random.uniform(k, shape, jnp.float32, -bound, bound)

    conv_fan_in = input_dim * 2
    w_high = unif(ks[1], (Co_half, input_dim, 2), conv_fan_in)
    b_high = unif(ks[2], (Co_half,), conv_fan_in)
    w_low = unif(ks[3], (Co_half, input_dim, 2), conv_fan_in)
    b_low = unif(ks[4], (Co_half,), conv_fan_in)
    w_rec = unif(ks[5], (output_dim, output_dim), output_dim)
    b_rec = unif(ks[6], (output_dim,), output_dim)

    def check(out, ref, shape):
        assert out.shape == shape, out.shape
        assert jnp.allclose(out, ref, atol=1e-4, rtol=1e-4), (
            float(jnp.max(jnp.abs(out - ref)))
        )

    # 1) Small shape: force the Pallas path so the kernel itself is exercised.
    out = wavelet_transform_layer(
        x, w_high, b_high, w_low, b_low, w_rec, b_rec, force_pallas=True
    )
    out = jax.block_until_ready(out)
    check(out, _reference(x, w_high, b_high, w_low, b_low, w_rec, b_rec),
          (B, T // 2, output_dim))

    # 2) Larger shape: takes the Pallas path naturally (N = 1024 rows).
    B2, T2 = 8, 256
    x2 = jax.random.normal(ks[7], (B2, T2, input_dim), dtype=jnp.float32)
    out2 = wavelet_transform_layer(x2, w_high, b_high, w_low, b_low, w_rec, b_rec)
    out2 = jax.block_until_ready(out2)
    check(out2, _reference(x2, w_high, b_high, w_low, b_low, w_rec, b_rec),
          (B2, T2 // 2, output_dim))

    # 3) Same input with a tiny VMEM budget override: exercises a multi-step
    #    "parallel" grid and the masked partial last block (no pad / slice).
    out3 = wavelet_transform_layer(
        x2, w_high, b_high, w_low, b_low, w_rec, b_rec,
        block_budget_override=48 * 1536,
    )
    out3 = jax.block_until_ready(out3)
    check(out3, _reference(x2, w_high, b_high, w_low, b_low, w_rec, b_rec),
          (B2, T2 // 2, output_dim))

    # 4) Awkward N (no lane-dense divisor): exercises the G=1 fallback path.
    B4, T4 = 3, 250
    x4 = jax.random.normal(ks[8], (B4, T4, input_dim), dtype=jnp.float32)
    out4 = wavelet_transform_layer(
        x4, w_high, b_high, w_low, b_low, w_rec, b_rec, force_pallas=True
    )
    out4 = jax.block_until_ready(out4)
    check(out4, _reference(x4, w_high, b_high, w_low, b_low, w_rec, b_rec),
          (B4, T4 // 2, output_dim))

    print("KERNEL_OK")
</pallas_src>

<mosaic_0001>
module attributes {stable_mosaic.version = 11 : i64} {
  func.func @_wavelet_fused_kernel(%arg0: i32, %arg1: memref<2x128xf32, #tpu.memory_space<vmem>>, %arg2: memref<128x256xf32, #tpu.memory_space<vmem>>, %arg3: memref<1x256xf32, #tpu.memory_space<vmem>>, %arg4: memref<2x256xf32, #tpu.memory_space<vmem>>) attributes {dimension_semantics = [#tpu.dimension_semantics<parallel>], iteration_bounds = array<i64: 1>, scalar_prefetch = 0 : i64, scratch_operands = 0 : i64, tpu.core_type = #tpu.core_type<tc>, window_params = [{transform_indices = @transform_0, window_bounds = array<i64: 2, 128>}, {pipeline_mode = #tpu.pipeline_mode<synchronous>, transform_indices = @transform_1, window_bounds = array<i64: 128, 256>}, {pipeline_mode = #tpu.pipeline_mode<synchronous>, transform_indices = @transform_2, window_bounds = array<i64: 1, 256>}, {transform_indices = @transform_3, window_bounds = array<i64: 2, 256>}]} {
    %c0 = arith.constant 0 : index
    %c0_0 = arith.constant 0 : index
    %0 = vector.load %arg1[%c0, %c0_0] : memref<2x128xf32, #tpu.memory_space<vmem>>, vector<2x128xf32>
    %c0_1 = arith.constant 0 : index
    %c0_2 = arith.constant 0 : index
    %1 = vector.load %arg2[%c0_1, %c0_2] : memref<128x256xf32, #tpu.memory_space<vmem>>, vector<128x256xf32>
    %cst = arith.constant dense<0.000000e+00> : vector<2x256xf32>
    %2 = tpu.matmul %0, %1, %cst {dimension_numbers = #tpu.dot_dimension_numbers<[1], [0], [0], [1], [0, 0, 1, 1], [], []>} : vector<2x128xf32>, vector<128x256xf32>, vector<2x256xf32> -> vector<2x256xf32>
    %c0_3 = arith.constant 0 : index
    %c0_4 = arith.constant 0 : index
    %3 = vector.load %arg3[%c0_3, %c0_4] : memref<1x256xf32, #tpu.memory_space<vmem>>, vector<1x256xf32>
    %4 = vector.broadcast %3 : vector<1x256xf32> to vector<2x256xf32>
    %5 = arith.addf %2, %4 : vector<2x256xf32>
    %c0_5 = arith.constant 0 : index
    %c0_6 = arith.constant 0 : index
    %6 = vector.load %arg4[%c0_5, %c0_6] : memref<2x256xf32, #tpu.memory_space<vmem>>, vector<2x256xf32>
    tpu.vector_store %arg4[%c0_5, %c0_6], %5 {strides = array<i32>} : memref<2x256xf32, #tpu.memory_space<vmem>>, vector<2x256xf32>,
    return
  }
  func.func @transform_0(%arg0: i32) -> (i32, i32) {
    %c0_i32 = arith.constant 0 : i32
    %c0_i32_0 = arith.constant 0 : i32
    return %arg0, %c0_i32 : i32, i32
  }
  func.func @transform_1(%arg0: i32) -> (i32, i32) {
    %c0_i32 = arith.constant 0 : i32
    %c0_i32_0 = arith.constant 0 : i32
    %c0_i32_1 = arith.constant 0 : i32
    return %c0_i32, %c0_i32_0 : i32, i32
  }
  func.func @transform_2(%arg0: i32) -> (i32, i32) {
    %c0_i32 = arith.constant 0 : i32
    %c0_i32_0 = arith.constant 0 : i32
    %c0_i32_1 = arith.constant 0 : i32
    return %c0_i32, %c0_i32_0 : i32, i32
  }
  func.func @transform_3(%arg0: i32) -> (i32, i32) {
    %c0_i32 = arith.constant 0 : i32
    %c0_i32_0 = arith.constant 0 : i32
    return %arg0, %c0_i32 : i32, i32
  }
}

</mosaic_0001>

<llo_original>
// kernel: tile.8
$region0: #{tile.8}
  #allocation0 [shape = 's32[1]{0}', space=sflag, size = 0x4, scoped, tag = 'scoped memory for tile.8']
  %s0 = inlined_call_operand.vmem [shape: f32[32], index: 0, kind: input, shape index: {}]
  %s1 = inlined_call_operand.vmem [shape: f32[8,32], index: 1, kind: output, shape index: {}]
  // Predicated region
  $region2: #{tile.8} parent=0 // pred_check
    _
  $region3: #{tile.8} parent=0 // pred_check_branch
    %3 = sbr.rel (0) target = $region5
  $region4: #{tile.8} parent=0 // pred_region
    _
  $region5: #{tile.8} parent=0 // pred_fallthru
    _
  %v4 = vld [vmem:[%s0] ss:$0 sm:$0xff]
  %5 = vst [vmem:[%s1] sm:$0xff] %v4

// kernel: tile.9
$region0: #{tile.9}
  %s0 = inlined_call_operand.vmem [shape: f32[8,32], index: 0, kind: input, shape index: {}]
  %s1 = inlined_call_operand.vmem [shape: f32[1,256], index: 1, kind: output, shape index: {}]
  $region1: #{tile.9} parent=0
    #allocation0 [shape = 'u8[8192]{0}', space=vmem, size = 0x2000, scoped, tag = 'scoped mem for output reshape']
    %s2 = smov 3
    %v3 = vld [vmem:[%s0] ss:$4 sm:%s2]
    %vm4 = vcmask 261120
    %5 = vst.msk [vmem:[#allocation0] ss:$8 sm:$0x3] %vm4, %v3
    %s6 = scalar_lea.vmem %s0, 3
    %s7 = smov 3
    %v8 = vld [vmem:[%s6] ss:$4 sm:%s7]
    %9 = vrot.lane.b32.xlu0 %v8, 96
    %v10 = vpop.permute.xlu0 %9
    %vm11 = vcmask 1048320
    %12 = vst.msk [vmem:[#allocation0] ss:$8 sm:$0x3] %vm11, %v10
    %s13 = scalar_lea.vmem %s0, 2
    %s14 = smov 3
    %v15 = vld [vmem:[%s13] ss:$4 sm:%s14]
    %16 = vrot.lane.b32.xlu0 %v15, 64
    %v17 = vpop.permute.xlu0 %16
    %vm18 = vcmask 785920
    %19 = vst.msk [vmem:[#allocation0] ss:$8 sm:$0x3] %vm18, %v17
    %s20 = scalar_lea.vmem %s0, 1
    %s21 = smov 3
    %v22 = vld [vmem:[%s20] ss:$4 sm:%s21]
    %23 = vrot.lane.b32.xlu0 %v22, 32
    %v24 = vpop.permute.xlu0 %23
    %vm25 = vcmask 523520
    %26 = vst.msk [vmem:[#allocation0] ss:$8 sm:$0x3] %vm25, %v24
    %s28 = sshllo.u32 0, 1
    %v30 = vld [vmem:[#allocation0] sm:%s28]
    %s31 = sshllo.u32 0, 1
    %32 = vst [vmem:[%s1] sm:%s31] %v30
    %s33 = scalar_lea.vmem [#allocation0], 8
    %v34 = vld [vmem:[%s33] sm:%s28]
    %s35 = sshllo.u32 0, 1
    %s36 = scalar_lea.vmem %s1, 1
    %37 = vst [vmem:[%s36] sm:%s35] %v34

// kernel: wavelet_transform_layer.1
$region0: #{wavelet_transform_layer.1}
  #allocation0 [shape = 'u32[]', space=smem, size = 0x4, offset = 0x4, fixed_abs, tag = 'smem constant byte address 0x4 - core index']
  #allocation1 [shape = 'u32[144,128]{1,0:T(1,128)}', space=vmem, size = 0x12000, scoped, tag = 'internal scratch']
  %s0 = inlined_call_operand.vmem [shape: f32[2,128], index: 0, kind: input, shape index: {}]
  %s1 = inlined_call_operand.vmem [shape: f32[128,256], index: 1, kind: input, shape index: {}]
  %s2 = inlined_call_operand.vmem [shape: f32[1,256], index: 2, kind: input, shape index: {}]
  %s3 = inlined_call_operand.vmem [shape: f32[2,256], index: 3, kind: output, shape index: {}]
  %s4 = sld [smem:[#allocation0]]
  $region22: #{wavelet_transform_layer.1} parent=0
    _
  %s6 = ssub.s32 1, %s4
  %s7 = scalar_select 0, %s6, %s4
  // Predicated region
  $region2: #{wavelet_transform_layer.1} parent=0 // pred_check
    _
  $region3: #{wavelet_transform_layer.1} parent=0 // pred_check_branch
    %9 = sbr.rel (0) target = $region5
  $region4: #{wavelet_transform_layer.1} parent=0 // pred_region
    _
  $region5: #{wavelet_transform_layer.1} parent=0 // pred_fallthru
    _
  // Predicated region
  $region6: #{wavelet_transform_layer.1} parent=0 // pred_check
    _
  $region7: #{wavelet_transform_layer.1} parent=0 // pred_check_branch
    %11 = sbr.rel (0) target = $region9
  $region8: #{wavelet_transform_layer.1} parent=0 // pred_region
    _
  $region9: #{wavelet_transform_layer.1} parent=0 // pred_fallthru
    _
  // Predicated region
  $region10: #{wavelet_transform_layer.1} parent=0 // pred_check
    _
  $region11: #{wavelet_transform_layer.1} parent=0 // pred_check_branch
    %13 = sbr.rel (0) target = $region13
  $region12: #{wavelet_transform_layer.1} parent=0 // pred_region
    _
  $region13: #{wavelet_transform_layer.1} parent=0 // pred_fallthru
    _
  %v14 = vld [vmem:[%s0] sm:$0x3]
  %v15 = vld [vmem:[%s1] sm:$0xff]
  %v16 = vld [vmem:[%s1 + $0x8] sm:$0xff]
  %v17 = vld [vmem:[%s1 + $0x10] sm:$0xff]
  %v18 = vld [vmem:[%s1 + $0x18] sm:$0xff]
  %v19 = vld [vmem:[%s1 + $0x20] sm:$0xff]
  %v20 = vld [vmem:[%s1 + $0x28] sm:$0xff]
  %v21 = vld [vmem:[%s1 + $0x30] sm:$0xff]
  %v22 = vld [vmem:[%s1 + $0x38] sm:$0xff]
  %v23 = vld [vmem:[%s1 + $0x40] sm:$0xff]
  %v24 = vld [vmem:[%s1 + $0x48] sm:$0xff]
  %v25 = vld [vmem:[%s1 + $0x50] sm:$0xff]
  %v26 = vld [vmem:[%s1 + $0x58] sm:$0xff]
  %v27 = vld [vmem:[%s1 + $0x60] sm:$0xff]
  %v28 = vld [vmem:[%s1 + $0x68] sm:$0xff]
  %v29 = vld [vmem:[%s1 + $0x70] sm:$0xff]
  %v30 = vld [vmem:[%s1 + $0x78] sm:$0xff]
  %v31 = vld [vmem:[%s1 + $0x80] sm:$0xff]
  %v32 = vld [vmem:[%s1 + $0x88] sm:$0xff]
  %v33 = vld [vmem:[%s1 + $0x90] sm:$0xff]
  %v34 = vld [vmem:[%s1 + $0x98] sm:$0xff]
  %v35 = vld [vmem:[%s1 + $0xa0] sm:$0xff]
  %v36 = vld [vmem:[%s1 + $0xa8] sm:$0xff]
  %v37 = vld [vmem:[%s1 + $0xb0] sm:$0xff]
  %v38 = vld [vmem:[%s1 + $0xb8] sm:$0xff]
  %v39 = vld [vmem:[%s1 + $0xc0] sm:$0xff]
  %v40 = vld [vmem:[%s1 + $0xc8] sm:$0xff]
  %v41 = vld [vmem:[%s1 + $0xd0] sm:$0xff]
  %v42 = vld [vmem:[%s1 + $0xd8] sm:$0xff]
  %v43 = vld [vmem:[%s1 + $0xe0] sm:$0xff]
  %v44 = vld [vmem:[%s1 + $0xe8] sm:$0xff]
  %v45 = vld [vmem:[%s1 + $0xf0] sm:$0xff]
  %v46 = vld [vmem:[%s1 + $0xf8] sm:$0xff]
  %v47 = vld [vmem:[%s2] sm:$0x3]
  %v49 = vlaneseq
  %v50 = vshrl.u32 %v49, 7
  %v51 = vsub.s32 0, %v50
  %v52 = vrot.slane %v47, %v51
  %v53 = vlaneseq
  %v54 = vshrl.u32 %v53, 7
  %v55 = vsub.s32 1, %v54
  %v56 = vrot.slane %v47, %v55
  %59 = vmatprep.subr.mxu0 %v16
  %60 = vmatpush1.msra.mxu0 %v15
  %61 = vmatprep.subr.mxu0 %v18
  %62 = vmatpush1.msra.mxu0 %v17
  %63 = vmatprep.subr.mxu0 %v20
  %64 = vmatpush1.msra.mxu0 %v19
  %65 = vmatprep.subr.mxu0 %v22
  %66 = vmatpush1.msra.mxu0 %v21
  %67 = vmatprep.subr.mxu0 %v24
  %68 = vmatpush1.msra.mxu0 %v23
  %69 = vmatprep.subr.mxu0 %v26
  %70 = vmatpush1.msra.mxu0 %v25
  %71 = vmatprep.subr.mxu0 %v28
  %72 = vmatpush1.msra.mxu0 %v27
  %73 = vmatprep.subr.mxu0 %v30
  %74 = vmatpush1.msra.mxu0 %v29
  %75 = vmatprep.subr.mxu0 %v32
  %76 = vmatpush1.msra.mxu0 %v31
  %77 = vmatprep.subr.mxu0 %v34
  %78 = vmatpush1.msra.mxu0 %v33
  %79 = vmatprep.subr.mxu0 %v36
  %80 = vmatpush1.msra.mxu0 %v35
  %81 = vmatprep.subr.mxu0 %v38
  %82 = vmatpush1.msra.mxu0 %v37
  %83 = vmatprep.subr.mxu0 %v40
  %84 = vmatpush1.msra.mxu0 %v39
  %85 = vmatprep.subr.mxu0 %v42
  %86 = vmatpush1.msra.mxu0 %v41
  %87 = vmatprep.subr.mxu0 %v44
  %88 = vmatpush1.msra.mxu0 %v43
  %89 = vmatprep.subr.mxu0 %v46
  %90 = vmatpush1.msra.mxu0 %v45
  %91 = vmatprep.subr.mxu0 0.0
  %92 = vmatpush1.msra.mxu0 0.0
  %93 = vmatprep.subr.mxu0 0.0
  %94 = vmatpush1.msra.mxu0 0.0
  %95 = vmatprep.subr.mxu0 0.0
  %96 = vmatpush1.msra.mxu0 0.0
  %97 = vmatprep.subr.mxu0 0.0
  %98 = vmatpush1.msra.mxu0 0.0
  %99 = vmatprep.subr.mxu0 0.0
  %100 = vmatpush1.msra.mxu0 0.0
  %101 = vmatprep.subr.mxu0 0.0
  %102 = vmatpush1.msra.mxu0 0.0
  %103 = vmatprep.subr.mxu0 0.0
  %104 = vmatpush1.msra.mxu0 0.0
  %105 = vmatprep.subr.mxu0 0.0
  %106 = vmatpush1.msra.mxu0 0.0
  %107 = vmatprep.subr.mxu0 0.0
  %108 = vmatpush1.msra.mxu0 0.0
  %109 = vmatprep.subr.mxu0 0.0
  %110 = vmatpush1.msra.mxu0 0.0
  %111 = vmatprep.subr.mxu0 0.0
  %112 = vmatpush1.msra.mxu0 0.0
  %113 = vmatprep.subr.mxu0 0.0
  %114 = vmatpush1.msra.mxu0 0.0
  %115 = vmatprep.subr.mxu0 0.0
  %116 = vmatpush1.msra.mxu0 0.0
  %117 = vmatprep.subr.mxu0 0.0
  %118 = vmatpush1.msra.mxu0 0.0
  %119 = vmatprep.subr.mxu0 0.0
  %120 = vmatpush1.msra.mxu0 0.0
  %121 = vmatprep.subr.mxu0 0.0
  %122 = vmatpush1.msra.mxu0 0.0
  %123 = vmatprep.mubr.f32.mxu0 0.0
  %124 = vmatmul.mubr.f32.gmra.mrb[0].mxu0 %v14
  %v125 = vpop.f32.mrb[0].mxu0
  %v126 = vadd.f32 %v52, %v125
  %v127 = vpop.f32.mrb[0].mxu0
  %v128 = vadd.f32 %v56, %v127
  %129 = vdwg.mxu0
  %v132 = vcombine.low %v126, %v128
  %v134 = vunpack.c.l.s4 1983009808
  %v135 = vunpack.c.0.s8 %v134
  %v136 = vlaneseq
  %v137 = vshrl.u32 %v136, 7
  %v138 = vsub.s32 %v135, %v137
  %v139 = vrot.slane %v132, %v138
  %141 = vst [vmem:[%s3] sm:$0xf] %v139
  // Predicated region
  $region14: #{wavelet_transform_layer.1} parent=0 // pred_check
    _
  $region15: #{wavelet_transform_layer.1} parent=0 // pred_check_branch
    %143 = sbr.rel (0) target = $region17
  $region16: #{wavelet_transform_layer.1} parent=0 // pred_region
    _
  $region17: #{wavelet_transform_layer.1} parent=0 // pred_fallthru
    _
  // Predicated region
  $region18: #{wavelet_transform_layer.1} parent=0 // pred_check
    _
  $region19: #{wavelet_transform_layer.1} parent=0 // pred_check_branch
    %145 = sbr.rel (0) target = $region21
  $region20: #{wavelet_transform_layer.1} parent=0 // pred_region
    _
  $region21: #{wavelet_transform_layer.1} parent=0 // pred_fallthru
    _

</llo_original>
